<compile_context>
chip_gen: v5e
topology: v5e:2x2
jax: 0.10.0
libtpu: 0.0.40
codegen_flags: <defaults>
</compile_context>

<pallas_src>
import jax
import jax.numpy as jnp
from jax.experimental import pallas as pl
from jax.experimental.pallas import tpu as pltpu


def _round_up(x: int, m: int) -> int:
    return ((x + m - 1) // m) * m


def _make_focal_loss_kernel(*, n_valid, tm, alpha, gamma, reduction):
    inv_n = 1.0 / float(n_valid)

    def kernel(x_ref, t_ref, o_ref):
        i = pl.program_id(0)

        @pl.when(i == 0)
        def _init():
            o_ref[...] = jnp.zeros_like(o_ref)

        x = x_ref[...]  # (tm, C)  f32 logits tile
        t = t_ref[...]  # (tm, 1)  i32 target class per row

        # Numerically-stable log_softmax over the class axis.
        m = jnp.max(x, axis=1, keepdims=True)
        s = x - m
        lse = jnp.log(jnp.sum(jnp.exp(s), axis=1, keepdims=True))
        logp = s - lse  # (tm, C)

        # Per-row "gather" of the target-class log-prob via one-hot select +
        # lane reduction (no per-row dynamic gather on TPU).
        cls = jax.lax.broadcasted_iota(jnp.int32, x.shape, 1)  # (tm, C)
        logp_t = jnp.sum(jnp.where(cls == t, logp, 0.0), axis=1, keepdims=True)

        ce = -logp_t                 # CE_loss, reduction='none'   (tm, 1)
        pt = jnp.exp(logp_t)         # pt = exp(-CE_loss)
        one_minus_pt = jnp.maximum(1.0 - pt, 0.0)
        if gamma == 2.0:             # static specialization of the default
            mod = one_minus_pt * one_minus_pt
        elif gamma == 1.0:
            mod = one_minus_pt
        elif gamma == 0.0:
            mod = jnp.ones_like(one_minus_pt)
        else:
            mod = jnp.power(one_minus_pt, jnp.float32(gamma))
        floss = alpha * mod * ce     # (tm, 1)

        # Mask rows past the true batch size (wrapper pads N to a tile multiple).
        row = i * tm + jax.lax.broadcasted_iota(jnp.int32, (tm, 1), 0)
        floss = jnp.where(row < n_valid, floss, 0.0)

        # Accumulate into the resident (1,1) output across the reduction grid.
        o_ref[...] += jnp.sum(floss, axis=0, keepdims=True)

        @pl.when(i == pl.num_programs(0) - 1)
        def _finalize():
            if reduction == "mean":
                o_ref[...] = o_ref[...] * inv_n

    return kernel


def focal_loss(logits, targets, *, alpha=1.0, gamma=2.0, reduction="mean", tm=128):
    """Fused focal loss. logits: [N, C] f32, targets: [N] int. Returns a scalar."""
    if reduction not in ("mean", "sum"):
        # TODO(synk): reduction='none' (per-sample loss vector output) is not
        # emitted by this fused kernel; only 'mean'/'sum' are reduced in-kernel.
        raise NotImplementedError("only 'mean' and 'sum' reductions are fused")

    n, c = logits.shape
    tm = min(tm, _round_up(n, 8))          # sublane-aligned row tile
    n_pad = _round_up(n, tm)
    if n_pad != n:
        logits = jnp.pad(logits, ((0, n_pad - n), (0, 0)))
        targets = jnp.pad(targets, ((0, n_pad - n),))
    t2d = targets.astype(jnp.int32)[:, None]      # (N_pad, 1) for 2-D blocks

    kernel = _make_focal_loss_kernel(
        n_valid=n, tm=tm, alpha=float(alpha), gamma=float(gamma), reduction=reduction
    )

    out = pl.pallas_call(
        kernel,
        out_shape=jax.ShapeDtypeStruct((1, 1), jnp.float32),
        grid_spec=pltpu.PrefetchScalarGridSpec(
            num_scalar_prefetch=0,
            grid=(n_pad // tm,),
            in_specs=[
                pl.BlockSpec((tm, c), lambda i: (i, 0)),   # logits row tile
                pl.BlockSpec((tm, 1), lambda i: (i, 0)),   # targets row tile
            ],
            out_specs=pl.BlockSpec((1, 1), lambda i: (0, 0)),  # resident accumulator
        ),
        compiler_params=pltpu.CompilerParams(
            # Single grid axis is a reduction into the resident output.
            dimension_semantics=("arbitrary",),
        ),
    )(logits, t2d)
    return out[0, 0]


if __name__ == "__main__":
    key = jax.random.PRNGKey(0)
    k_logits, k_targets = jax.random.split(key)

    # Small shapes consistent with the module: a batch of class logits and
    # integer target labels (threat-attribution classifier outputs).
    N, C = 256, 16
    logits = jax.random.normal(k_logits, (N, C), dtype=jnp.float32)
    targets = jax.random.randint(k_targets, (N,), 0, C, dtype=jnp.int32)

    out = focal_loss(logits, targets, alpha=1.0, gamma=2.0, reduction="mean")
    jax.block_until_ready(out)

    # Plain-JAX reference (mirrors the PyTorch module exactly).
    logp_ref = jax.nn.log_softmax(logits, axis=1)
    ce_ref = -jnp.take_along_axis(logp_ref, targets[:, None], axis=1)[:, 0]
    pt_ref = jnp.exp(-ce_ref)
    ref = jnp.mean(1.0 * (1.0 - pt_ref) ** 2 * ce_ref)

    assert out.shape == ()
    assert bool(jnp.isfinite(out))
    assert bool(jnp.abs(out - ref) < 1e-5 * (1.0 + jnp.abs(ref)))

    print("KERNEL_OK")
</pallas_src>

<mosaic_0001>
module attributes {stable_mosaic.version = 11 : i64} {
  func.func @kernel(%arg0: i32, %arg1: memref<128x16xf32, #tpu.memory_space<vmem>>, %arg2: memref<128x1xi32, #tpu.memory_space<vmem>>, %arg3: memref<1x1xf32, #tpu.memory_space<vmem>>) attributes {dimension_semantics = [#tpu.dimension_semantics<arbitrary>], iteration_bounds = array<i64: 2>, scalar_prefetch = 0 : i64, scratch_operands = 0 : i64, tpu.core_type = #tpu.core_type<tc>, window_params = [{transform_indices = @transform_0, window_bounds = array<i64: 128, 16>}, {transform_indices = @transform_1, window_bounds = array<i64: 128, 1>}, {pipeline_mode = #tpu.pipeline_mode<synchronous>, transform_indices = @transform_2, window_bounds = array<i64: 1, 1>}]} {
    %c0_i32 = arith.constant 0 : i32
    %0 = arith.cmpi eq, %arg0, %c0_i32 : i32
    %1 = arith.extui %0 : i1 to i32
    %c0_i32_0 = arith.constant 0 : i32
    %2 = arith.cmpi ne, %1, %c0_i32_0 : i32
    scf.if %2 {
      %cst_18 = arith.constant 0.000000e+00 : f32
      %49 = vector.broadcast %cst_18 : f32 to vector<1x1xf32>
      %c0_19 = arith.constant 0 : index
      %c0_20 = arith.constant 0 : index
      %50 = vector.load %arg3[%c0_19, %c0_20] : memref<1x1xf32, #tpu.memory_space<vmem>>, vector<1x1xf32>
      tpu.vector_store %arg3[%c0_19, %c0_20], %49 {strides = array<i32>} : memref<1x1xf32, #tpu.memory_space<vmem>>, vector<1x1xf32>,
    } else {
    }
    %c0 = arith.constant 0 : index
    %c0_1 = arith.constant 0 : index
    %3 = vector.load %arg1[%c0, %c0_1] : memref<128x16xf32, #tpu.memory_space<vmem>>, vector<128x16xf32>
    %c0_2 = arith.constant 0 : index
    %c0_3 = arith.constant 0 : index
    %4 = vector.load %arg2[%c0_2, %c0_3] : memref<128x1xi32, #tpu.memory_space<vmem>>, vector<128x1xi32>
    %cst = arith.constant dense<0xFF800000> : vector<128xf32>
    %5 = vector.multi_reduction <maximumf>, %3, %cst [1] : vector<128x16xf32> to vector<128xf32>
    %6 = vector.shape_cast %5 : vector<128xf32> to vector<128x1xf32>
    %7 = vector.broadcast %6 : vector<128x1xf32> to vector<128x16xf32>
    %8 = arith.subf %3, %7 : vector<128x16xf32>
    %9 = math.exp %8 : vector<128x16xf32>
    %cst_4 = arith.constant dense<0.000000e+00> : vector<128xf32>
    %10 = vector.multi_reduction <add>, %9, %cst_4 [1] : vector<128x16xf32> to vector<128xf32>
    %11 = vector.shape_cast %10 : vector<128xf32> to vector<128x1xf32>
    %12 = math.log %11 : vector<128x1xf32>
    %13 = vector.broadcast %12 : vector<128x1xf32> to vector<128x16xf32>
    %14 = arith.subf %8, %13 : vector<128x16xf32>
    %15 = tpu.iota {dimensions = array<i32: 1>} : vector<128x16xi32>
    %16 = vector.broadcast %4 : vector<128x1xi32> to vector<128x16xi32>
    %17 = arith.cmpi eq, %15, %16 : vector<128x16xi32>
    %cst_5 = arith.constant 0.000000e+00 : f32
    %18 = vector.broadcast %cst_5 : f32 to vector<128x16xf32>
    %19 = arith.select %17, %14, %18 : vector<128x16xi1>, vector<128x16xf32>
    %cst_6 = arith.constant dense<0.000000e+00> : vector<128xf32>
    %20 = vector.multi_reduction <add>, %19, %cst_6 [1] : vector<128x16xf32> to vector<128xf32>
    %21 = vector.shape_cast %20 : vector<128xf32> to vector<128x1xf32>
    %cst_7 = arith.constant 0.000000e+00 : f32
    %22 = vector.broadcast %cst_7 : f32 to vector<128x1xf32>
    %23 = arith.subf %22, %21 : vector<128x1xf32>
    %24 = math.exp %21 : vector<128x1xf32>
    %cst_8 = arith.constant 1.000000e+00 : f32
    %25 = vector.broadcast %cst_8 : f32 to vector<128x1xf32>
    %26 = arith.subf %25, %24 : vector<128x1xf32>
    %cst_9 = arith.constant 0.000000e+00 : f32
    %27 = vector.broadcast %cst_9 : f32 to vector<128x1xf32>
    %28 = arith.maximumf %26, %27 : vector<128x1xf32>
    %29 = arith.mulf %28, %28 : vector<128x1xf32>
    %cst_10 = arith.constant 1.000000e+00 : f32
    %30 = vector.broadcast %cst_10 : f32 to vector<128x1xf32>
    %31 = arith.mulf %30, %29 : vector<128x1xf32>
    %32 = arith.mulf %31, %23 : vector<128x1xf32>
    %c128_i32 = arith.constant 128 : i32
    %33 = arith.muli %arg0, %c128_i32 : i32
    %34 = tpu.iota {dimensions = array<i32: 0>} : vector<128x1xi32>
    %35 = vector.broadcast %33 : i32 to vector<128x1xi32>
    %36 = arith.addi %35, %34 : vector<128x1xi32>
    %c256_i32 = arith.constant 256 : i32
    %37 = vector.broadcast %c256_i32 : i32 to vector<128x1xi32>
    %38 = arith.cmpi slt, %36, %37 : vector<128x1xi32>
    %cst_11 = arith.constant 0.000000e+00 : f32
    %39 = vector.broadcast %cst_11 : f32 to vector<128x1xf32>
    %40 = arith.select %38, %32, %39 : vector<128x1xi1>, vector<128x1xf32>
    %c0_12 = arith.constant 0 : index
    %c0_13 = arith.constant 0 : index
    %41 = vector.load %arg3[%c0_12, %c0_13] : memref<1x1xf32, #tpu.memory_space<vmem>>, vector<1x1xf32>
    %cst_14 = arith.constant dense<0.000000e+00> : vector<1xf32>
    %42 = vector.multi_reduction <add>, %40, %cst_14 [0] : vector<128x1xf32> to vector<1xf32>
    %43 = vector.shape_cast %42 : vector<1xf32> to vector<1x1xf32>
    %44 = arith.addf %41, %43 : vector<1x1xf32>
    %c0_15 = arith.constant 0 : index
    %c0_16 = arith.constant 0 : index
    %45 = vector.load %arg3[%c0_15, %c0_16] : memref<1x1xf32, #tpu.memory_space<vmem>>, vector<1x1xf32>
    tpu.vector_store %arg3[%c0_15, %c0_16], %44 {strides = array<i32>} : memref<1x1xf32, #tpu.memory_space<vmem>>, vector<1x1xf32>,
    %c1_i32 = arith.constant 1 : i32
    %46 = arith.cmpi eq, %arg0, %c1_i32 : i32
    %47 = arith.extui %46 : i1 to i32
    %c0_i32_17 = arith.constant 0 : i32
    %48 = arith.cmpi ne, %47, %c0_i32_17 : i32
    scf.if %48 {
      %c0_18 = arith.constant 0 : index
      %c0_19 = arith.constant 0 : index
      %49 = vector.load %arg3[%c0_18, %c0_19] : memref<1x1xf32, #tpu.memory_space<vmem>>, vector<1x1xf32>
      %cst_20 = arith.constant 3.906250e-03 : f32
      %50 = vector.broadcast %cst_20 : f32 to vector<1x1xf32>
      %51 = arith.mulf %49, %50 : vector<1x1xf32>
      %c0_21 = arith.constant 0 : index
      %c0_22 = arith.constant 0 : index
      %52 = vector.load %arg3[%c0_21, %c0_22] : memref<1x1xf32, #tpu.memory_space<vmem>>, vector<1x1xf32>
      tpu.vector_store %arg3[%c0_21, %c0_22], %51 {strides = array<i32>} : memref<1x1xf32, #tpu.memory_space<vmem>>, vector<1x1xf32>,
    } else {
    }
    return
  }
  func.func @transform_0(%arg0: i32) -> (i32, i32) {
    %c0_i32 = arith.constant 0 : i32
    %c0_i32_0 = arith.constant 0 : i32
    return %arg0, %c0_i32 : i32, i32
  }
  func.func @transform_1(%arg0: i32) -> (i32, i32) {
    %c0_i32 = arith.constant 0 : i32
    %c0_i32_0 = arith.constant 0 : i32
    return %arg0, %c0_i32 : i32, i32
  }
  func.func @transform_2(%arg0: i32) -> (i32, i32) {
    %c0_i32 = arith.constant 0 : i32
    %c0_i32_0 = arith.constant 0 : i32
    %c0_i32_1 = arith.constant 0 : i32
    return %c0_i32, %c0_i32_0 : i32, i32
  }
}

</mosaic_0001>

<llo_original>
// kernel: tpu_custom_call.1
$region0: #{tpu_custom_call.1}
  #allocation0 [shape = 'u32[]', space=smem, size = 0x4, offset = 0x4, fixed_abs, tag = 'smem constant byte address 0x4 - core index']
  #allocation1 [shape = 'u32[72,128]{1,0:T(1,128)}', space=vmem, size = 0x9000, scoped, tag = 'internal scratch']
  %s0 = inlined_call_operand.vmem [shape: f32[256,16], index: 0, kind: input, shape index: {}]
  %s1 = inlined_call_operand.vmem [shape: s32[256,1], index: 1, kind: input, shape index: {}]
  %s2 = inlined_call_operand.hbm [shape: f32[1,1], index: 2, kind: output, shape index: {}]
  %s3 = sld [smem:[#allocation0]]
  $region49: #{tpu_custom_call.1} parent=0
    _
  %s5 = ssub.s32 1, %s3
  %s6 = scalar_select 0, %s5, %s3
  $region1: #{tpu_custom_call.1} parent=0
    #allocation2 [shape = 'u8[512]{0}', space=vmem, size = 0x400, scoped, tag = 'output window, operand 0, single buffered']
    #allocation3 [shape = 's32[2]{0}', space=sflag, size = 0x8, scoped, tag = 'scoped memory for tpu_custom_call.1']
    %7 = vsyncpa [#allocation3], 0
    loop: start=0, step=1, limit=4
    $region2: #{tpu_custom_call.1} parent=1 // loop_pre_header
      _
    $region3: #{tpu_custom_call.1} parent=1 // loop_header
      %s9 = sphi 0, %s13
      %p10 = scmp.ge.s32.totalorder %s9, 4
      %s19 = sphi 0, %s21
      %s22 = sphi 0, %s19
      %s23 = sphi 0, %s22
      %s39 = sphi 0, %s23
      %s45 = sphi 0, %s47
      %s48 = sphi 0, %s45
      %s49 = sphi 0, %s48
      %s65 = sphi 0, %s49
      %s69 = sphi 0, %s69
      %s71 = sphi 0, %s69
      %s72 = sphi 0, %s71
      %s86 = sphi 0, %s72
    $region4: #{tpu_custom_call.1} parent=1 // loop_header_branch
      %12 = sbr.rel (%p10) target = $region8
    $region5: #{tpu_custom_call.1} parent=1 // loop_body
      %s14 = ssub.s32 %s9, 1
      %s15 = ssub.s32 %s9, 2
      %s16 = sadd.s32 %s9, 1
      %s17 = ssub.s32 %s9, %s16
      %p18 = scmp.eq.s32.totalorder %s17, 0
      %s20 = sadd.s32 %s19, 1
      %s21 = scalar_select %p18, %s19, %s20
      %p24 = pneg %p18
      %p25 = scmp.eq.s32.totalorder %s9, 1
      %p26 = por %p24, %p25
      %p27 = scmp.ne.s32.totalorder %s19, %s22
      %p28 = scmp.eq.s32.totalorder %s9, 0
      %p29 = por %p27, %p28
      %p30 = scmp.ne.s32.totalorder %s19, %s22
      %p31 = scmp.eq.s32.totalorder %s14, 1
      %p32 = por %p30, %p31
      %p33 = scmp.ne.s32.totalorder %s22, %s23
      %p34 = scmp.eq.s32.totalorder %s14, 0
      %p35 = por %p33, %p34
      %p36 = scmp.ne.s32.totalorder %s22, %s23
      %p37 = scmp.eq.s32.totalorder %s15, 1
      %p38 = por %p36, %p37
      %p40 = scmp.ne.s32.totalorder %s23, %s39
      %p41 = scmp.eq.s32.totalorder %s15, 0
      %p42 = por %p40, %p41
      %s43 = ssub.s32 %s9, %s16
      %p44 = scmp.eq.s32.totalorder %s43, 0
      %s46 = sadd.s32 %s45, 1
      %s47 = scalar_select %p44, %s45, %s46
      %p50 = pneg %p44
      %p51 = scmp.eq.s32.totalorder %s9, 1
      %p52 = por %p50, %p51
      %p53 = scmp.ne.s32.totalorder %s45, %s48
      %p54 = scmp.eq.s32.totalorder %s9, 0
      %p55 = por %p53, %p54
      %p56 = scmp.ne.s32.totalorder %s45, %s48
      %p57 = scmp.eq.s32.totalorder %s14, 1
      %p58 = por %p56, %p57
      %p59 = scmp.ne.s32.totalorder %s48, %s49
      %p60 = scmp.eq.s32.totalorder %s14, 0
      %p61 = por %p59, %p60
      %p62 = scmp.ne.s32.totalorder %s48, %s49
      %p63 = scmp.eq.s32.totalorder %s15, 1
      %p64 = por %p62, %p63
      %p66 = scmp.ne.s32.totalorder %s49, %s65
      %p67 = scmp.eq.s32.totalorder %s15, 0
      %p68 = por %p66, %p67
      %s70 = sadd.s32 %s69, 1
      %p73 = scmp.eq.s32.totalorder %s9, 1
      %p74 = scmp.ne.s32.totalorder %s69, %s71
      %p75 = scmp.eq.s32.totalorder %s9, 0
      %p76 = por %p74, %p75
      %p77 = scmp.ne.s32.totalorder %s69, %s71
      %p78 = scmp.eq.s32.totalorder %s14, 1
      %p79 = por %p77, %p78
      %p80 = scmp.ne.s32.totalorder %s71, %s72
      %p81 = scmp.eq.s32.totalorder %s14, 0
      %p82 = por %p80, %p81
      %p83 = scmp.ne.s32.totalorder %s71, %s72
      %p84 = scmp.eq.s32.totalorder %s15, 1
      %p85 = por %p83, %p84
      %p87 = scmp.ne.s32.totalorder %s72, %s86
      %p88 = scmp.eq.s32.totalorder %s15, 0
      %p89 = por %p87, %p88
      %p90 = scmp.le.s32.totalorder 1, %s9
      %p91 = scmp.lt.s32.totalorder %s9, 3
      %p92 = pnand %p90, %p91
      %p93 = pneg %p92
      // Predicated region
      $region9: #{tpu_custom_call.1} parent=5 // pred_check
        _
      $region10: #{tpu_custom_call.1} parent=5 // pred_check_branch
        %95 = sbr.rel (%p92) target = $region12
      $region11: #{tpu_custom_call.1} parent=5 // pred_region
        %s96 = ssub.s32 %s9, 1
      $region12: #{tpu_custom_call.1} parent=5 // pred_fallthru
        _
      %p97 = scmp.lt.s32.totalorder %s9, 2
      // Predicated region
      $region13: #{tpu_custom_call.1} parent=5 // pred_check
        %p98 = pneg %p97
      $region14: #{tpu_custom_call.1} parent=5 // pred_check_branch
        %100 = sbr.rel (%p98) target = $region16
      $region15: #{tpu_custom_call.1} parent=5 // pred_region
        // Predicated region
        $region17: #{tpu_custom_call.1} parent=15 // pred_check
          %p101 = pneg %p29
        $region18: #{tpu_custom_call.1} parent=15 // pred_check_branch
          %103 = sbr.rel (%p101) target = $region20
        $region19: #{tpu_custom_call.1} parent=15 // pred_region
          %s104 = smul.u32 16, %s9
          %p105 = scmp.lt.s32.totalorder %s104, 31
          %s106 = scalar_select %p105, %s104, 31
          %s107 = smul.addr %s106, 8
          %s108 = scalar_lea.vmem %s0, %s107
          %s109 = smul.u32 16, %s9
        $region20: #{tpu_custom_call.1} parent=15 // pred_fallthru
          _
        // Predicated region
        $region21: #{tpu_custom_call.1} parent=15 // pred_check
          %p110 = pneg %p55
        $region22: #{tpu_custom_call.1} parent=15 // pred_check_branch
          %112 = sbr.rel (%p110) target = $region24
        $region23: #{tpu_custom_call.1} parent=15 // pred_region
          %s113 = smul.u32 16, %s9
          %p114 = scmp.lt.s32.totalorder %s113, 31
          %s115 = scalar_select %p114, %s113, 31
          %s116 = smul.addr %s115, 8
          %s117 = scalar_lea.vmem %s1, %s116
          %s118 = smul.u32 16, %s9
        $region24: #{tpu_custom_call.1} parent=15 // pred_fallthru
          _
      $region16: #{tpu_custom_call.1} parent=5 // pred_fallthru
        _
      %p119 = scmp.le.s32.totalorder 1, %s9
      %p120 = scmp.lt.s32.totalorder %s9, 3
      %p121 = pnand %p119, %p120
      %p122 = pneg %p121
      // Predicated region
      $region25: #{tpu_custom_call.1} parent=5 // pred_check
        _
      $region26: #{tpu_custom_call.1} parent=5 // pred_check_branch
        %124 = sbr.rel (%p121) target = $region28
      $region27: #{tpu_custom_call.1} parent=5 // pred_region
        %s125 = ssub.s32 %s9, 1
        %s126 = smul.u32 16, %s14
        %p127 = scmp.lt.s32.totalorder %s126, 31
        %s128 = scalar_select %p127, %s126, 31
        %s129 = smul.addr %s128, 8
        %s130 = scalar_lea.vmem %s0, %s129
        %p131 = pneg %p35
        %p132 = pneg %p32
        %s133 = smul.u32 16, %s14
        %p134 = scmp.lt.s32.totalorder %s133, 31
        %s135 = scalar_select %p134, %s133, 31
        %s136 = smul.addr %s135, 8
        %s137 = scalar_lea.vmem %s1, %s136
        %p138 = pneg %p61
        %p139 = pneg %p58
        %p140 = pneg %p82
        %p141 = pneg %p79
        %s142 = smul.u32 16, %s14
        %p143 = scmp.lt.s32.totalorder %s142, 31
        %s144 = scalar_select %p143, %s142, 31
        %s145 = smul.addr %s144, 8
        %s146 = scalar_lea.vmem %s0, %s145
        %s147 = smul.u32 16, %s14
        %s148 = smul.u32 16, %s14
        %p149 = scmp.lt.s32.totalorder %s148, 31
        %s150 = scalar_select %p149, %s148, 31
        %s151 = smul.addr %s150, 8
        %s152 = scalar_lea.vmem %s1, %s151
        %s153 = smul.u32 16, %s14
        %p154 = scmp.eq.s32.totalorder %s14, 0
        // Predicated region
        $region29: #{tpu_custom_call.1} parent=27 // pred_check
          %p155 = pneg %p154
        $region30: #{tpu_custom_call.1} parent=27 // pred_check_branch
          %157 = sbr.rel (%p155) target = $region32
        $region31: #{tpu_custom_call.1} parent=27 // pred_region
          %vm158 = vcmask 0
          %159 = vst.msk [vmem:[#allocation2] sm:$0x1] %vm158, 0.0
        $region32: #{tpu_custom_call.1} parent=27 // pred_fallthru
          _
        %v160 = vld [vmem:[%s146] sm:$0xff]
        %v161 = vld [vmem:[%s146 + $0x8] sm:$0xff]
        %v162 = vld [vmem:[%s146 + $0x10] sm:$0xff]
        %v163 = vld [vmem:[%s146 + $0x18] sm:$0xff]
        %v164 = vld [vmem:[%s146 + $0x20] sm:$0xff]
        %v165 = vld [vmem:[%s146 + $0x28] sm:$0xff]
        %v166 = vld [vmem:[%s146 + $0x30] sm:$0xff]
        %v167 = vld [vmem:[%s146 + $0x38] sm:$0xff]
        %v168 = vld [vmem:[%s146 + $0x40] sm:$0xff]
        %v169 = vld [vmem:[%s146 + $0x48] sm:$0xff]
        %v170 = vld [vmem:[%s146 + $0x50] sm:$0xff]
        %v171 = vld [vmem:[%s146 + $0x58] sm:$0xff]
        %v172 = vld [vmem:[%s146 + $0x60] sm:$0xff]
        %v173 = vld [vmem:[%s146 + $0x68] sm:$0xff]
        %v174 = vld [vmem:[%s146 + $0x70] sm:$0xff]
        %v175 = vld [vmem:[%s146 + $0x78] sm:$0xff]
        %v176 = vld [vmem:[%s152] sm:$0xff]
        %v177 = vld [vmem:[%s152 + $0x8] sm:$0xff]
        %v178 = vld [vmem:[%s152 + $0x10] sm:$0xff]
        %v179 = vld [vmem:[%s152 + $0x18] sm:$0xff]
        %v180 = vld [vmem:[%s152 + $0x20] sm:$0xff]
        %v181 = vld [vmem:[%s152 + $0x28] sm:$0xff]
        %v182 = vld [vmem:[%s152 + $0x30] sm:$0xff]
        %v183 = vld [vmem:[%s152 + $0x38] sm:$0xff]
        %v184 = vld [vmem:[%s152 + $0x40] sm:$0xff]
        %v185 = vld [vmem:[%s152 + $0x48] sm:$0xff]
        %v186 = vld [vmem:[%s152 + $0x50] sm:$0xff]
        %v187 = vld [vmem:[%s152 + $0x58] sm:$0xff]
        %v188 = vld [vmem:[%s152 + $0x60] sm:$0xff]
        %v189 = vld [vmem:[%s152 + $0x68] sm:$0xff]
        %v190 = vld [vmem:[%s152 + $0x70] sm:$0xff]
        %v191 = vld [vmem:[%s152 + $0x78] sm:$0xff]
        %vm192 = vcmask 130048
        %v193 = vsel %vm192, %v160, -inf
        %194 = vmax.xlane.f32.xlu0 %v193
        %v195 = vpop.xlane.xlu0 %194
        %v196 = vsel %vm192, %v161, -inf
        %197 = vmax.xlane.f32.xlu0 %v196
        %v198 = vpop.xlane.xlu0 %197
        %v199 = vsel %vm192, %v162, -inf
        %200 = vmax.xlane.f32.xlu0 %v199
        %v201 = vpop.xlane.xlu0 %200
        %v202 = vsel %vm192, %v163, -inf
        %203 = vmax.xlane.f32.xlu0 %v202
        %v204 = vpop.xlane.xlu0 %203
        %v205 = vsel %vm192, %v164, -inf
        %206 = vmax.xlane.f32.xlu0 %v205
        %v207 = vpop.xlane.xlu0 %206
        %v208 = vsel %vm192, %v165, -inf
        %209 = vmax.xlane.f32.xlu0 %v208
        %v210 = vpop.xlane.xlu0 %209
        %v211 = vsel %vm192, %v166, -inf
        %212 = vmax.xlane.f32.xlu0 %v211
        %v213 = vpop.xlane.xlu0 %212
        %v214 = vsel %vm192, %v167, -inf
        %215 = vmax.xlane.f32.xlu0 %v214
        %v216 = vpop.xlane.xlu0 %215
        %v217 = vsel %vm192, %v168, -inf
        %218 = vmax.xlane.f32.xlu0 %v217
        %v219 = vpop.xlane.xlu0 %218
        %v220 = vsel %vm192, %v169, -inf
        %221 = vmax.xlane.f32.xlu0 %v220
        %v222 = vpop.xlane.xlu0 %221
        %v223 = vsel %vm192, %v170, -inf
        %224 = vmax.xlane.f32.xlu0 %v223
        %v225 = vpop.xlane.xlu0 %224
        %v226 = vsel %vm192, %v171, -inf
        %227 = vmax.xlane.f32.xlu0 %v226
        %v228 = vpop.xlane.xlu0 %227
        %v229 = vsel %vm192, %v172, -inf
        %230 = vmax.xlane.f32.xlu0 %v229
        %v231 = vpop.xlane.xlu0 %230
        %v232 = vsel %vm192, %v173, -inf
        %233 = vmax.xlane.f32.xlu0 %v232
        %v234 = vpop.xlane.xlu0 %233
        %v235 = vsel %vm192, %v174, -inf
        %236 = vmax.xlane.f32.xlu0 %v235
        %v237 = vpop.xlane.xlu0 %236
        %v238 = vsel %vm192, %v175, -inf
        %239 = vmax.xlane.f32.xlu0 %v238
        %v240 = vpop.xlane.xlu0 %239
        %v241 = vsub.f32 %v160, %v195
        %v242 = vsub.f32 %v161, %v198
        %v243 = vsub.f32 %v162, %v201
        %v244 = vsub.f32 %v163, %v204
        %v245 = vsub.f32 %v164, %v207
        %v246 = vsub.f32 %v165, %v210
        %v247 = vsub.f32 %v166, %v213
        %v248 = vsub.f32 %v167, %v216
        %v249 = vsub.f32 %v168, %v219
        %v250 = vsub.f32 %v169, %v222
        %v251 = vsub.f32 %v170, %v225
        %v252 = vsub.f32 %v171, %v228
        %v253 = vsub.f32 %v172, %v231
        %v254 = vsub.f32 %v173, %v234
        %v255 = vsub.f32 %v174, %v237
        %v256 = vsub.f32 %v175, %v240
        %v257 = vmul.f32 %v241, 1.442695
        %v258 = vpow.pop %v257
        %v259 = vmul.f32 %v242, 1.442695
        %v260 = vpow.pop %v259
        %v261 = vmul.f32 %v243, 1.442695
        %v262 = vpow.pop %v261
        %v263 = vmul.f32 %v244, 1.442695
        %v264 = vpow.pop %v263
        %v265 = vmul.f32 %v245, 1.442695
        %v266 = vpow.pop %v265
        %v267 = vmul.f32 %v246, 1.442695
        %v268 = vpow.pop %v267
        %v269 = vmul.f32 %v247, 1.442695
        %v270 = vpow.pop %v269
        %v271 = vmul.f32 %v248, 1.442695
        %v272 = vpow.pop %v271
        %v273 = vmul.f32 %v249, 1.442695
        %v274 = vpow.pop %v273
        %v275 = vmul.f32 %v250, 1.442695
        %v276 = vpow.pop %v275
        %v277 = vmul.f32 %v251, 1.442695
        %v278 = vpow.pop %v277
        %v279 = vmul.f32 %v252, 1.442695
        %v280 = vpow.pop %v279
        %v281 = vmul.f32 %v253, 1.442695
        %v282 = vpow.pop %v281
        %v283 = vmul.f32 %v254, 1.442695
        %v284 = vpow.pop %v283
        %v285 = vmul.f32 %v255, 1.442695
        %v286 = vpow.pop %v285
        %v287 = vmul.f32 %v256, 1.442695
        %v288 = vpow.pop %v287
        %v289 = vsel %vm192, %v258, 0.0
        %290 = vadd.xlane.f32.xlu0 %v289
        %v291 = vpop.xlane.xlu0 %290
        %v292 = vsel %vm192, %v260, 0.0
        %293 = vadd.xlane.f32.xlu0 %v292
        %v294 = vpop.xlane.xlu0 %293
        %v295 = vsel %vm192, %v262, 0.0
        %296 = vadd.xlane.f32.xlu0 %v295
        %v297 = vpop.xlane.xlu0 %296
        %v298 = vsel %vm192, %v264, 0.0
        %299 = vadd.xlane.f32.xlu0 %v298
        %v300 = vpop.xlane.xlu0 %299
        %v301 = vsel %vm192, %v266, 0.0
        %302 = vadd.xlane.f32.xlu0 %v301
        %v303 = vpop.xlane.xlu0 %302
        %v304 = vsel %vm192, %v268, 0.0
        %305 = vadd.xlane.f32.xlu0 %v304
        %v306 = vpop.xlane.xlu0 %305
        %v307 = vsel %vm192, %v270, 0.0
        %308 = vadd.xlane.f32.xlu0 %v307
        %v309 = vpop.xlane.xlu0 %308
        %v310 = vsel %vm192, %v272, 0.0
        %311 = vadd.xlane.f32.xlu0 %v310
        %v312 = vpop.xlane.xlu0 %311
        %v313 = vsel %vm192, %v274, 0.0
        %314 = vadd.xlane.f32.xlu0 %v313
        %v315 = vpop.xlane.xlu0 %314
        %v316 = vsel %vm192, %v276, 0.0
        %317 = vadd.xlane.f32.xlu0 %v316
        %v318 = vpop.xlane.xlu0 %317
        %v319 = vsel %vm192, %v278, 0.0
        %320 = vadd.xlane.f32.xlu0 %v319
        %v321 = vpop.xlane.xlu0 %320
        %v322 = vsel %vm192, %v280, 0.0
        %323 = vadd.xlane.f32.xlu0 %v322
        %v324 = vpop.xlane.xlu0 %323
        %v325 = vsel %vm192, %v282, 0.0
        %326 = vadd.xlane.f32.xlu0 %v325
        %v327 = vpop.xlane.xlu0 %326
        %v328 = vsel %vm192, %v284, 0.0
        %329 = vadd.xlane.f32.xlu0 %v328
        %v330 = vpop.xlane.xlu0 %329
        %v331 = vsel %vm192, %v286, 0.0
        %332 = vadd.xlane.f32.xlu0 %v331
        %v333 = vpop.xlane.xlu0 %332
        %v334 = vsel %vm192, %v288, 0.0
        %335 = vadd.xlane.f32.xlu0 %v334
        %v336 = vpop.xlane.xlu0 %335
        %v337 = vlog2.pop %v291
        %v338 = vmul.f32 %v337, 0.6931472
        %v339 = vlog2.pop %v294
        %v340 = vmul.f32 %v339, 0.6931472
        %v341 = vlog2.pop %v297
        %v342 = vmul.f32 %v341, 0.6931472
        %v343 = vlog2.pop %v300
        %v344 = vmul.f32 %v343, 0.6931472
        %v345 = vlog2.pop %v303
        %v346 = vmul.f32 %v345, 0.6931472
        %v347 = vlog2.pop %v306
        %v348 = vmul.f32 %v347, 0.6931472
        %v349 = vlog2.pop %v309
        %v350 = vmul.f32 %v349, 0.6931472
        %v351 = vlog2.pop %v312
        %v352 = vmul.f32 %v351, 0.6931472
        %v353 = vlog2.pop %v315
        %v354 = vmul.f32 %v353, 0.6931472
        %v355 = vlog2.pop %v318
        %v356 = vmul.f32 %v355, 0.6931472
        %v357 = vlog2.pop %v321
        %v358 = vmul.f32 %v357, 0.6931472
        %v359 = vlog2.pop %v324
        %v360 = vmul.f32 %v359, 0.6931472
        %v361 = vlog2.pop %v327
        %v362 = vmul.f32 %v361, 0.6931472
        %v363 = vlog2.pop %v330
        %v364 = vmul.f32 %v363, 0.6931472
        %v365 = vlog2.pop %v333
        %v366 = vmul.f32 %v365, 0.6931472
        %v367 = vlog2.pop %v336
        %v368 = vmul.f32 %v367, 0.6931472
        %v369 = vsub.f32 %v241, %v338
        %v370 = vsub.f32 %v242, %v340
        %v371 = vsub.f32 %v243, %v342
        %v372 = vsub.f32 %v244, %v344
        %v373 = vsub.f32 %v245, %v346
        %v374 = vsub.f32 %v246, %v348
        %v375 = vsub.f32 %v247, %v350
        %v376 = vsub.f32 %v248, %v352
        %v377 = vsub.f32 %v249, %v354
        %v378 = vsub.f32 %v250, %v356
        %v379 = vsub.f32 %v251, %v358
        %v380 = vsub.f32 %v252, %v360
        %v381 = vsub.f32 %v253, %v362
        %v382 = vsub.f32 %v254, %v364
        %v383 = vsub.f32 %v255, %v366
        %v384 = vsub.f32 %v256, %v368
        %v385 = vlaneseq
        %v386 = vand.u32 %v385, 127
        %387 = vset.pattern.permute.xlu0 0
        %388 = vperm.xlu0 %387, %v176
        %v389 = vpop.permute.xlu0 %388
        %390 = vset.pattern.permute.xlu0 0
        %391 = vperm.xlu0 %390, %v177
        %v392 = vpop.permute.xlu0 %391
        %393 = vset.pattern.permute.xlu0 0
        %394 = vperm.xlu0 %393, %v178
        %v395 = vpop.permute.xlu0 %394
        %396 = vset.pattern.permute.xlu0 0
        %397 = vperm.xlu0 %396, %v179
        %v398 = vpop.permute.xlu0 %397
        %399 = vset.pattern.permute.xlu0 0
        %400 = vperm.xlu0 %399, %v180
        %v401 = vpop.permute.xlu0 %400
        %402 = vset.pattern.permute.xlu0 0
        %403 = vperm.xlu0 %402, %v181
        %v404 = vpop.permute.xlu0 %403
        %405 = vset.pattern.permute.xlu0 0
        %406 = vperm.xlu0 %405, %v182
        %v407 = vpop.permute.xlu0 %406
        %408 = vset.pattern.permute.xlu0 0
        %409 = vperm.xlu0 %408, %v183
        %v410 = vpop.permute.xlu0 %409
        %411 = vset.pattern.permute.xlu0 0
        %412 = vperm.xlu0 %411, %v184
        %v413 = vpop.permute.xlu0 %412
        %414 = vset.pattern.permute.xlu0 0
        %415 = vperm.xlu0 %414, %v185
        %v416 = vpop.permute.xlu0 %415
        %417 = vset.pattern.permute.xlu0 0
        %418 = vperm.xlu0 %417, %v186
        %v419 = vpop.permute.xlu0 %418
        %420 = vset.pattern.permute.xlu0 0
        %421 = vperm.xlu0 %420, %v187
        %v422 = vpop.permute.xlu0 %421
        %423 = vset.pattern.permute.xlu0 0
        %424 = vperm.xlu0 %423, %v188
        %v425 = vpop.permute.xlu0 %424
        %426 = vset.pattern.permute.xlu0 0
        %427 = vperm.xlu0 %426, %v189
        %v428 = vpop.permute.xlu0 %427
        %429 = vset.pattern.permute.xlu0 0
        %430 = vperm.xlu0 %429, %v190
        %v431 = vpop.permute.xlu0 %430
        %432 = vset.pattern.permute.xlu0 0
        %433 = vperm.xlu0 %432, %v191
        %v434 = vpop.permute.xlu0 %433
        %vm435 = vcmp.eq.s32.totalorder %v386, %v389
        %vm436 = vcmp.eq.s32.totalorder %v386, %v392
        %vm437 = vcmp.eq.s32.totalorder %v386, %v395
        %vm438 = vcmp.eq.s32.totalorder %v386, %v398
        %vm439 = vcmp.eq.s32.totalorder %v386, %v401
        %vm440 = vcmp.eq.s32.totalorder %v386, %v404
        %vm441 = vcmp.eq.s32.totalorder %v386, %v407
        %vm442 = vcmp.eq.s32.totalorder %v386, %v410
        %vm443 = vcmp.eq.s32.totalorder %v386, %v413
        %vm444 = vcmp.eq.s32.totalorder %v386, %v416
        %vm445 = vcmp.eq.s32.totalorder %v386, %v419
        %vm446 = vcmp.eq.s32.totalorder %v386, %v422
        %vm447 = vcmp.eq.s32.totalorder %v386, %v425
        %vm448 = vcmp.eq.s32.totalorder %v386, %v428
        %vm449 = vcmp.eq.s32.totalorder %v386, %v431
        %vm450 = vcmp.eq.s32.totalorder %v386, %v434
        %v451 = vsel %vm435, %v369, 0.0
        %v452 = vsel %vm436, %v370, 0.0
        %v453 = vsel %vm437, %v371, 0.0
        %v454 = vsel %vm438, %v372, 0.0
        %v455 = vsel %vm439, %v373, 0.0
        %v456 = vsel %vm440, %v374, 0.0
        %v457 = vsel %vm441, %v375, 0.0
        %v458 = vsel %vm442, %v376, 0.0
        %v459 = vsel %vm443, %v377, 0.0
        %v460 = vsel %vm444, %v378, 0.0
        %v461 = vsel %vm445, %v379, 0.0
        %v462 = vsel %vm446, %v380, 0.0
        %v463 = vsel %vm447, %v381, 0.0
        %v464 = vsel %vm448, %v382, 0.0
        %v465 = vsel %vm449, %v383, 0.0
        %v466 = vsel %vm450, %v384, 0.0
        %v467 = vsel %vm192, %v451, 0.0
        %468 = vadd.xlane.f32.xlu0 %v467
        %v469 = vpop.xlane.xlu0 %468
        %v470 = vsel %vm192, %v452, 0.0
        %471 = vadd.xlane.f32.xlu0 %v470
        %v472 = vpop.xlane.xlu0 %471
        %v473 = vsel %vm192, %v453, 0.0
        %474 = vadd.xlane.f32.xlu0 %v473
        %v475 = vpop.xlane.xlu0 %474
        %v476 = vsel %vm192, %v454, 0.0
        %477 = vadd.xlane.f32.xlu0 %v476
        %v478 = vpop.xlane.xlu0 %477
        %v479 = vsel %vm192, %v455, 0.0
        %480 = vadd.xlane.f32.xlu0 %v479
        %v481 = vpop.xlane.xlu0 %480
        %v482 = vsel %vm192, %v456, 0.0
        %483 = vadd.xlane.f32.xlu0 %v482
        %v484 = vpop.xlane.xlu0 %483
        %v485 = vsel %vm192, %v457, 0.0
        %486 = vadd.xlane.f32.xlu0 %v485
        %v487 = vpop.xlane.xlu0 %486
        %v488 = vsel %vm192, %v458, 0.0
        %489 = vadd.xlane.f32.xlu0 %v488
        %v490 = vpop.xlane.xlu0 %489
        %v491 = vsel %vm192, %v459, 0.0
        %492 = vadd.xlane.f32.xlu0 %v491
        %v493 = vpop.xlane.xlu0 %492
        %v494 = vsel %vm192, %v460, 0.0
        %495 = vadd.xlane.f32.xlu0 %v494
        %v496 = vpop.xlane.xlu0 %495
        %v497 = vsel %vm192, %v461, 0.0
        %498 = vadd.xlane.f32.xlu0 %v497
        %v499 = vpop.xlane.xlu0 %498
        %v500 = vsel %vm192, %v462, 0.0
        %501 = vadd.xlane.f32.xlu0 %v500
        %v502 = vpop.xlane.xlu0 %501
        %v503 = vsel %vm192, %v463, 0.0
        %504 = vadd.xlane.f32.xlu0 %v503
        %v505 = vpop.xlane.xlu0 %504
        %v506 = vsel %vm192, %v464, 0.0
        %507 = vadd.xlane.f32.xlu0 %v506
        %v508 = vpop.xlane.xlu0 %507
        %v509 = vsel %vm192, %v465, 0.0
        %510 = vadd.xlane.f32.xlu0 %v509
        %v511 = vpop.xlane.xlu0 %510
        %v512 = vsel %vm192, %v466, 0.0
        %513 = vadd.xlane.f32.xlu0 %v512
        %v514 = vpop.xlane.xlu0 %513
        %v515 = vsub.f32 0.0, %v469
        %v516 = vsub.f32 0.0, %v472
        %v517 = vsub.f32 0.0, %v475
        %v518 = vsub.f32 0.0, %v478
        %v519 = vsub.f32 0.0, %v481
        %v520 = vsub.f32 0.0, %v484
        %v521 = vsub.f32 0.0, %v487
        %v522 = vsub.f32 0.0, %v490
        %v523 = vsub.f32 0.0, %v493
        %v524 = vsub.f32 0.0, %v496
        %v525 = vsub.f32 0.0, %v499
        %v526 = vsub.f32 0.0, %v502
        %v527 = vsub.f32 0.0, %v505
        %v528 = vsub.f32 0.0, %v508
        %v529 = vsub.f32 0.0, %v511
        %v530 = vsub.f32 0.0, %v514
        %v531 = vmul.f32 %v469, 1.442695
        %v532 = vpow.pop %v531
        %v533 = vmul.f32 %v472, 1.442695
        %v534 = vpow.pop %v533
        %v535 = vmul.f32 %v475, 1.442695
        %v536 = vpow.pop %v535
        %v537 = vmul.f32 %v478, 1.442695
        %v538 = vpow.pop %v537
        %v539 = vmul.f32 %v481, 1.442695
        %v540 = vpow.pop %v539
        %v541 = vmul.f32 %v484, 1.442695
        %v542 = vpow.pop %v541
        %v543 = vmul.f32 %v487, 1.442695
        %v544 = vpow.pop %v543
        %v545 = vmul.f32 %v490, 1.442695
        %v546 = vpow.pop %v545
        %v547 = vmul.f32 %v493, 1.442695
        %v548 = vpow.pop %v547
        %v549 = vmul.f32 %v496, 1.442695
        %v550 = vpow.pop %v549
        %v551 = vmul.f32 %v499, 1.442695
        %v552 = vpow.pop %v551
        %v553 = vmul.f32 %v502, 1.442695
        %v554 = vpow.pop %v553
        %v555 = vmul.f32 %v505, 1.442695
        %v556 = vpow.pop %v555
        %v557 = vmul.f32 %v508, 1.442695
        %v558 = vpow.pop %v557
        %v559 = vmul.f32 %v511, 1.442695
        %v560 = vpow.pop %v559
        %v561 = vmul.f32 %v514, 1.442695
        %v562 = vpow.pop %v561
        %v563 = vsub.f32 1.0, %v532
        %v564 = vsub.f32 1.0, %v534
        %v565 = vsub.f32 1.0, %v536
        %v566 = vsub.f32 1.0, %v538
        %v567 = vsub.f32 1.0, %v540
        %v568 = vsub.f32 1.0, %v542
        %v569 = vsub.f32 1.0, %v544
        %v570 = vsub.f32 1.0, %v546
        %v571 = vsub.f32 1.0, %v548
        %v572 = vsub.f32 1.0, %v550
        %v573 = vsub.f32 1.0, %v552
        %v574 = vsub.f32 1.0, %v554
        %v575 = vsub.f32 1.0, %v556
        %v576 = vsub.f32 1.0, %v558
        %v577 = vsub.f32 1.0, %v560
        %v578 = vsub.f32 1.0, %v562
        %v579 = vmax.f32 %v563, 0.0
        %v580 = vmax.f32 %v564, 0.0
        %v581 = vmax.f32 %v565, 0.0
        %v582 = vmax.f32 %v566, 0.0
        %v583 = vmax.f32 %v567, 0.0
        %v584 = vmax.f32 %v568, 0.0
        %v585 = vmax.f32 %v569, 0.0
        %v586 = vmax.f32 %v570, 0.0
        %v587 = vmax.f32 %v571, 0.0
        %v588 = vmax.f32 %v572, 0.0
        %v589 = vmax.f32 %v573, 0.0
        %v590 = vmax.f32 %v574, 0.0
        %v591 = vmax.f32 %v575, 0.0
        %v592 = vmax.f32 %v576, 0.0
        %v593 = vmax.f32 %v577, 0.0
        %v594 = vmax.f32 %v578, 0.0
        %v595 = vmul.f32 %v579, %v579
        %v596 = vmul.f32 %v580, %v580
        %v597 = vmul.f32 %v581, %v581
        %v598 = vmul.f32 %v582, %v582
        %v599 = vmul.f32 %v583, %v583
        %v600 = vmul.f32 %v584, %v584
        %v601 = vmul.f32 %v585, %v585
        %v602 = vmul.f32 %v586, %v586
        %v603 = vmul.f32 %v587, %v587
        %v604 = vmul.f32 %v588, %v588
        %v605 = vmul.f32 %v589, %v589
        %v606 = vmul.f32 %v590, %v590
        %v607 = vmul.f32 %v591, %v591
        %v608 = vmul.f32 %v592, %v592
        %v609 = vmul.f32 %v593, %v593
        %v610 = vmul.f32 %v594, %v594
        %v611 = vmul.f32 %v595, %v515
        %v612 = vmul.f32 %v596, %v516
        %v613 = vmul.f32 %v597, %v517
        %v614 = vmul.f32 %v598, %v518
        %v615 = vmul.f32 %v599, %v519
        %v616 = vmul.f32 %v600, %v520
        %v617 = vmul.f32 %v601, %v521
        %v618 = vmul.f32 %v602, %v522
        %v619 = vmul.f32 %v603, %v523
        %v620 = vmul.f32 %v604, %v524
        %v621 = vmul.f32 %v605, %v525
        %v622 = vmul.f32 %v606, %v526
        %v623 = vmul.f32 %v607, %v527
        %v624 = vmul.f32 %v608, %v528
        %v625 = vmul.f32 %v609, %v529
        %v626 = vmul.f32 %v610, %v530
        %s627 = smul.u32 %s14, 128
        %v628 = vlaneseq
        %v629 = vshrl.u32 %v628, 7
        %v630 = vadd.s32 %v629, 8
        %v631 = vadd.s32 %v629, 16
        %v632 = vadd.s32 %v629, 24
        %v633 = vadd.s32 %v629, 32
        %v634 = vadd.s32 %v629, 40
        %v635 = vadd.s32 %v629, 48
        %v636 = vadd.s32 %v629, 56
        %v637 = vadd.s32 %v629, 64
        %v638 = vadd.s32 %v629, 72
        %v639 = vadd.s32 %v629, 80
        %v640 = vadd.s32 %v629, 88
        %v641 = vadd.s32 %v629, 96
        %v642 = vadd.s32 %v629, 104
        %v643 = vadd.s32 %v629, 112
        %v644 = vadd.s32 %v629, 120
        %v645 = vstv %s627
        %v646 = vadd.s32 %v645, %v629
        %v647 = vadd.s32 %v645, %v630
        %v648 = vadd.s32 %v645, %v631
        %v649 = vadd.s32 %v645, %v632
        %v650 = vadd.s32 %v645, %v633
        %v651 = vadd.s32 %v645, %v634
        %v652 = vadd.s32 %v645, %v635
        %v653 = vadd.s32 %v645, %v636
        %v654 = vadd.s32 %v645, %v637
        %v655 = vadd.s32 %v645, %v638
        %v656 = vadd.s32 %v645, %v639
        %v657 = vadd.s32 %v645, %v640
        %v658 = vadd.s32 %v645, %v641
        %v659 = vadd.s32 %v645, %v642
        %v660 = vadd.s32 %v645, %v643
        %v661 = vadd.s32 %v645, %v644
        %vm662 = vcmp.lt.s32.totalorder %v646, 256
        %vm663 = vcmp.lt.s32.totalorder %v647, 256
        %vm664 = vcmp.lt.s32.totalorder %v648, 256
        %vm665 = vcmp.lt.s32.totalorder %v649, 256
        %vm666 = vcmp.lt.s32.totalorder %v650, 256
        %vm667 = vcmp.lt.s32.totalorder %v651, 256
        %vm668 = vcmp.lt.s32.totalorder %v652, 256
        %vm669 = vcmp.lt.s32.totalorder %v653, 256
        %vm670 = vcmp.lt.s32.totalorder %v654, 256
        %vm671 = vcmp.lt.s32.totalorder %v655, 256
        %vm672 = vcmp.lt.s32.totalorder %v656, 256
        %vm673 = vcmp.lt.s32.totalorder %v657, 256
        %vm674 = vcmp.lt.s32.totalorder %v658, 256
        %vm675 = vcmp.lt.s32.totalorder %v659, 256
        %vm676 = vcmp.lt.s32.totalorder %v660, 256
        %vm677 = vcmp.lt.s32.totalorder %v661, 256
        %v678 = vsel %vm662, %v611, 0.0
        %v679 = vsel %vm663, %v612, 0.0
        %v680 = vsel %vm664, %v613, 0.0
        %v681 = vsel %vm665, %v614, 0.0
        %v682 = vsel %vm666, %v615, 0.0
        %v683 = vsel %vm667, %v616, 0.0
        %v684 = vsel %vm668, %v617, 0.0
        %v685 = vsel %vm669, %v618, 0.0
        %v686 = vsel %vm670, %v619, 0.0
        %v687 = vsel %vm671, %v620, 0.0
        %v688 = vsel %vm672, %v621, 0.0
        %v689 = vsel %vm673, %v622, 0.0
        %v690 = vsel %vm674, %v623, 0.0
        %v691 = vsel %vm675, %v624, 0.0
        %v692 = vsel %vm676, %v625, 0.0
        %v693 = vsel %vm677, %v626, 0.0
        %v694 = vld [vmem:[#allocation2] sm:$0x1]
        %v695 = vadd.f32 %v678, %v679
        %v696 = vadd.f32 %v695, %v680
        %v697 = vadd.f32 %v696, %v681
        %v698 = vadd.f32 %v697, %v682
        %v699 = vadd.f32 %v698, %v683
        %v700 = vadd.f32 %v699, %v684
        %v701 = vadd.f32 %v700, %v685
        %v702 = vadd.f32 %v701, %v686
        %v703 = vadd.f32 %v702, %v687
        %v704 = vadd.f32 %v703, %v688
        %v705 = vadd.f32 %v704, %v689
        %v706 = vadd.f32 %v705, %v690
        %v707 = vadd.f32 %v706, %v691
        %v708 = vadd.f32 %v707, %v692
        %v709 = vadd.f32 %v708, %v693
        %v710 = vrot.slane %v709, 4
        %v711 = vadd.f32 %v709, %v710
        %v712 = vrot.slane %v711, 2
        %v713 = vadd.f32 %v711, %v712
        %v714 = vrot.slane %v713, 1
        %v715 = vadd.f32 %v713, %v714
        %v716 = vadd.f32 %v694, %v715
        %vm717 = vcmask 0
        %718 = vst.msk [vmem:[#allocation2] sm:$0x1] %vm717, %v716
        %p719 = scmp.eq.s32.totalorder %s14, 1
        // Predicated region
        $region33: #{tpu_custom_call.1} parent=27 // pred_check
          %p720 = pneg %p719
        $region34: #{tpu_custom_call.1} parent=27 // pred_check_branch
          %722 = sbr.rel (%p720) target = $region36
        $region35: #{tpu_custom_call.1} parent=27 // pred_region
          %v723 = vld [vmem:[#allocation2] sm:$0x1]
          %v724 = vmul.f32 %v723, 0.00390625
          %725 = vst.msk [vmem:[#allocation2] sm:$0x1] %vm717, %v724
        $region36: #{tpu_custom_call.1} parent=27 // pred_fallthru
          _
        // Predicated region
        $region37: #{tpu_custom_call.1} parent=27 // pred_check
          %p726 = pneg %p79
        $region38: #{tpu_custom_call.1} parent=27 // pred_check_branch
          %728 = sbr.rel (%p726) target = $region40
        $region39: #{tpu_custom_call.1} parent=27 // pred_region
          %730 = vsyncadd [#allocation3], 0
          %s732 = sshll.u32 [#allocation2], 4
          %s733 = int_to_ptr.vmem [resolvable:$true] %s732
          %s734 = sshll.u32 %s2, 4
          %s735 = int_to_ptr.hbm [resolvable:$true] %s734
          %737 = dma.vmem_to_hbm [thread:$0]  %s733, 16, %s735, [#allocation3]
        $region40: #{tpu_custom_call.1} parent=27 // pred_fallthru
          _
        // Predicated region
        $region41: #{tpu_custom_call.1} parent=27 // pred_check
          %p738 = pneg %p79
        $region42: #{tpu_custom_call.1} parent=27 // pred_check_branch
          %740 = sbr.rel (%p738) target = $region44
        $region43: #{tpu_custom_call.1} parent=27 // pred_region
          %742 = dma.done [#allocation3], 16
        $region44: #{tpu_custom_call.1} parent=27 // pred_fallthru
          _
      $region28: #{tpu_custom_call.1} parent=5 // pred_fallthru
        _
      %p743 = scmp.le.s32.totalorder 2, %s9
      // Predicated region
      $region45: #{tpu_custom_call.1} parent=5 // pred_check
        %p744 = pneg %p743
      $region46: #{tpu_custom_call.1} parent=5 // pred_check_branch
        %746 = sbr.rel (%p744) target = $region48
      $region47: #{tpu_custom_call.1} parent=5 // pred_region
        %s747 = ssub.s32 %s9, 2
      $region48: #{tpu_custom_call.1} parent=5 // pred_fallthru
        _
    $region6: #{tpu_custom_call.1} parent=1 // loop_footer
      %s13 = sadd.s32 1, %s9
    $region7: #{tpu_custom_call.1} parent=1 // loop_footer_branch
      %8 = sbr.rel target = $region3
    $region8: #{tpu_custom_call.1} parent=1 // loop_exit
      _
    %748 = vsyncpa [#allocation3], 1
    %s749 = scalar_lea.sflag [#allocation3], 1
    %750 = vsyncpa %s749, 1

</llo_original>
